<compile_context>
chip_gen: v7x
topology: tpu7x:2x2x1
jax: 0.10.0
libtpu: 0.0.40
codegen_flags: <defaults>
</compile_context>

<pallas_src>
import jax
import jax.numpy as jnp
from jax.experimental import pallas as pl
from jax.experimental.pallas import tpu as pltpu


def _sublane_multiple(dtype):
    """Sublane packing granularity: 8 for 4-byte, 16 for 2-byte, 32 for 1-byte."""
    itemsize = jnp.dtype(dtype).itemsize
    return max(8, 32 // itemsize)


def _vmem_budget_bytes():
    """Per-step (double-buffered) VMEM budget, generation-aware."""
    try:
        cap = pltpu.get_tpu_info().vmem_capacity_bytes
    except Exception:
        cap = 64 * 1024 * 1024  # be conservative if query unavailable
    if cap >= 128 * 1024 * 1024:       # v5e / v6e
        return 16 * 1024 * 1024
    return 8 * 1024 * 1024             # v7x (64 MiB physical VMEM)


def _pick_row_tile(rows, hw_pad, dtype, budget_bytes):
    """Largest row tile Rt whose double-buffered (in + out) blocks fit the
    budget; Rt is either the full extent or a dtype-aware sublane multiple."""
    itemsize = jnp.dtype(dtype).itemsize
    sub = _sublane_multiple(dtype)
    per_row = 4 * hw_pad * itemsize          # 2 buffers x (in + out) per row
    max_rt = max(1, budget_bytes // per_row)
    if rows <= max_rt:
        rt = rows                            # full extent: always a legal block
    else:
        rt = max(sub, (max_rt // sub) * sub)
    # If everything landed in a single (large) row block, split it in two so
    # both TensorCores on megacore parts get work; skip for tiny inputs where
    # the extra grid step would just be overhead.
    if rt == rows and rows >= 2 * sub and rt * hw_pad * itemsize >= (2 << 20):
        rt = ((pl.cdiv(rows, 2) + sub - 1) // sub) * sub
    return rt


def _copy_kernel(x_ref, o_ref):
    # x_ref: (Rt, HWp)   o_ref: (Rt, HWp)  -- pure lane-dense copy; the repeat
    # factor is an innermost grid axis, so one store per loaded tile.
    o_ref[...] = x_ref[...]


def repeat_pallas(x, r=2):
    """einops.repeat(x, 'b c h w -> b (c r) h w', r=r) as a Pallas TPU kernel."""
    B, C, H, W = x.shape
    hw = H * W
    rows = B * C
    itemsize = jnp.dtype(x.dtype).itemsize

    # Lane-dense trailing axis; pad to a multiple of 128 if needed.
    hw_pad = ((hw + 127) // 128) * 128
    x2 = x.reshape(rows, hw)
    if hw_pad != hw:
        x2 = jnp.pad(x2, ((0, 0), (0, hw_pad - hw)))

    rt = _pick_row_tile(rows, hw_pad, x.dtype, _vmem_budget_bytes())
    n_row_blocks = pl.cdiv(rows, rt)

    block_bytes = rt * hw_pad * itemsize
    vmem_limit = int(2 * (block_bytes + block_bytes) + 4 * 1024 * 1024)

    out = pl.pallas_call(
        _copy_kernel,
        out_shape=jax.ShapeDtypeStruct((rows, r * hw_pad), x.dtype),
        grid_spec=pltpu.PrefetchScalarGridSpec(
            num_scalar_prefetch=0,
            grid=(n_row_blocks, r),
            # Input block index ignores k -> not re-fetched across the r axis.
            in_specs=[pl.BlockSpec((rt, hw_pad), lambda i, k: (i, 0))],
            out_specs=pl.BlockSpec((rt, hw_pad), lambda i, k: (i, k)),
        ),
        compiler_params=pltpu.CompilerParams(
            dimension_semantics=("parallel", "arbitrary"),
            vmem_limit_bytes=vmem_limit,
        ),
    )(x2)

    # (B*C, r*HWp) -> (B, C, r, HWp) -> slice pad -> (B, C*r, H, W): exactly
    # the einops '(c r)' merge (repeat_interleave along channels).  Contiguous
    # reshapes/slice handled by XLA outside the kernel.
    out = out.reshape(B, C, r, hw_pad)
    if hw_pad != hw:
        out = out[..., :hw]
    return out.reshape(B, C * r, H, W)


if __name__ == "__main__":
    key = jax.random.PRNGKey(0)

    # Main check: Repeat('b c h w -> b (c r) h w', r=2) at the spec's shape.
    x = jax.random.normal(key, (2, 4, 16, 16), dtype=jnp.float32)
    out = jax.block_until_ready(repeat_pallas(x, r=2))
    ref = jnp.repeat(x, 2, axis=1)
    assert out.shape == (2, 8, 16, 16), out.shape
    assert jnp.array_equal(out, ref), "mismatch vs einops.repeat semantics"

    # Extra check: non-multiple-of-128 spatial (exercises the lane-pad path).
    x2 = jax.random.normal(jax.random.PRNGKey(1), (2, 3, 7, 7), dtype=jnp.float32)
    out2 = jax.block_until_ready(repeat_pallas(x2, r=3))
    ref2 = jnp.repeat(x2, 3, axis=1)
    assert out2.shape == (2, 9, 7, 7), out2.shape
    assert jnp.array_equal(out2, ref2), "mismatch on padded-hw path"

    # TODO(synk): generic einops-recipe parsing (arbitrary patterns/kwargs) is
    # not translated; the kernel is specialized to 'b c h w -> b (c r) h w'.
    print("KERNEL_OK")
</pallas_src>

<mosaic_0001>
module attributes {stable_mosaic.version = 11 : i64} {
  func.func @_copy_kernel(%arg0: i32, %arg1: i32, %arg2: memref<8x256xf32, #tpu.memory_space<vmem>>, %arg3: memref<8x256xf32, #tpu.memory_space<vmem>>) attributes {dimension_semantics = [#tpu.dimension_semantics<parallel>, #tpu.dimension_semantics<arbitrary>], iteration_bounds = array<i64: 1, 2>, scalar_prefetch = 0 : i64, scratch_operands = 0 : i64, tpu.core_type = #tpu.core_type<tc>, window_params = [{transform_indices = @transform_0, window_bounds = array<i64: 8, 256>}, {transform_indices = @transform_1, window_bounds = array<i64: 8, 256>}]} {
    %c0 = arith.constant 0 : index
    %c0_0 = arith.constant 0 : index
    %0 = vector.load %arg2[%c0, %c0_0] : memref<8x256xf32, #tpu.memory_space<vmem>>, vector<8x256xf32>
    %c0_1 = arith.constant 0 : index
    %c0_2 = arith.constant 0 : index
    %1 = vector.load %arg3[%c0_1, %c0_2] : memref<8x256xf32, #tpu.memory_space<vmem>>, vector<8x256xf32>
    tpu.vector_store %arg3[%c0_1, %c0_2], %0 {strides = array<i32>} : memref<8x256xf32, #tpu.memory_space<vmem>>, vector<8x256xf32>,
    return
  }
  func.func @transform_0(%arg0: i32, %arg1: i32) -> (i32, i32) {
    %c0_i32 = arith.constant 0 : i32
    %c0_i32_0 = arith.constant 0 : i32
    return %arg0, %c0_i32 : i32, i32
  }
  func.func @transform_1(%arg0: i32, %arg1: i32) -> (i32, i32) {
    %c0_i32 = arith.constant 0 : i32
    return %arg0, %arg1 : i32, i32
  }
}

</mosaic_0001>

<llo_original>
// kernel: tpu_custom_call.1
$region0: #{tpu_custom_call.1}
  #allocation0 [shape = 'u32[]', space=smem, size = 0x4, offset = 0x4, fixed_abs, tag = 'smem constant byte address 0x4 - core index']
  #allocation1 [shape = 'u32[144,128]{1,0:T(1,128)}', space=vmem, size = 0x12000, scoped, tag = 'internal scratch']
  %s0 = inlined_call_operand.hbm [shape: f32[8,256], index: 0, kind: input, shape index: {}]
  %s1 = inlined_call_operand.hbm [shape: f32[8,512], index: 1, kind: output, shape index: {}]
  %s2 = sld [smem:[#allocation0]]
  $region41: #{tpu_custom_call.1} parent=0
    _
  %s4 = ssub.s32 1, %s2
  %s5 = scalar_select 0, %s4, %s2
  $region1: #{tpu_custom_call.1} parent=0
    #allocation2 [shape = 'u8[8192]{0}', space=vmem, size = 0x2000, scoped, tag = 'input window, operand 0, single buffered']
    #allocation3 [shape = 's32[2]{0}', space=sflag, size = 0x8, scoped, tag = 'scoped memory for tpu_custom_call.1']
    #allocation4 [shape = 's32[2]{0}', space=sflag, size = 0x8, scoped, tag = 'scoped memory for tpu_custom_call.1']
    #allocation5 [shape = 'u8[16384]{0}', space=vmem, size = 0x4000, scoped, tag = 'output window, operand 0']
    %6 = vsyncpa [#allocation3], 0
    %7 = vsyncpa [#allocation4], 0
    %s8 = scalar_lea.sflag [#allocation4], 1
    %9 = vsyncpa %s8, 0
    loop: start=0, step=1, limit=4
    $region2: #{tpu_custom_call.1} parent=1 // loop_pre_header
      _
    $region3: #{tpu_custom_call.1} parent=1 // loop_header
      %s11 = sphi 0, %s15
      %p12 = scmp.ge.s32.totalorder %s11, 4
      %s18 = sphi 0, %s30
      %s19 = sphi 0, %s26
      %s20 = sphi 0, %s18
      %s21 = sphi 0, %s19
      %s22 = sphi 0, %s20
      %s23 = sphi 0, %s21
      %s33 = sphi 0, %s35
      %s36 = sphi 0, %s33
      %s37 = sphi 0, %s36
      %s53 = sphi 0, %s37
      %s61 = sphi 0, %s63
      %s64 = sphi 0, %s61
      %s65 = sphi 0, %s64
      %s81 = sphi 0, %s65
    $region4: #{tpu_custom_call.1} parent=1 // loop_header_branch
      %14 = sbr.rel (%p12) target = $region8
    $region5: #{tpu_custom_call.1} parent=1 // loop_body
      %s16 = ssub.s32 %s11, 1
      %s17 = ssub.s32 %s11, 2
      %s24 = sadd.s32 1, %s19
      %p25 = scmp.ge.s32.totalorder %s24, 2
      %s26 = scalar_select %p25, 0, %s24
      %s27 = sadd.s32 1, %s18
      %s28 = scalar_select %p25, %s27, %s18
      %p29 = scmp.ge.s32.totalorder %s28, 1
      %s30 = scalar_select %p29, 0, %s28
      %s31 = ssub.s32 %s18, %s30
      %p32 = scmp.eq.s32.totalorder %s31, 0
      %s34 = sadd.s32 %s33, 1
      %s35 = scalar_select %p32, %s33, %s34
      %p38 = pneg %p32
      %p39 = scmp.eq.s32.totalorder %s11, 1
      %p40 = por %p38, %p39
      %p41 = scmp.ne.s32.totalorder %s33, %s36
      %p42 = scmp.eq.s32.totalorder %s11, 0
      %p43 = por %p41, %p42
      %p44 = scmp.ne.s32.totalorder %s33, %s36
      %p45 = scmp.eq.s32.totalorder %s16, 1
      %p46 = por %p44, %p45
      %p47 = scmp.ne.s32.totalorder %s36, %s37
      %p48 = scmp.eq.s32.totalorder %s16, 0
      %p49 = por %p47, %p48
      %p50 = scmp.ne.s32.totalorder %s36, %s37
      %p51 = scmp.eq.s32.totalorder %s17, 1
      %p52 = por %p50, %p51
      %p54 = scmp.ne.s32.totalorder %s37, %s53
      %p55 = scmp.eq.s32.totalorder %s17, 0
      %p56 = por %p54, %p55
      %s57 = ssub.s32 %s18, %s30
      %s58 = ssub.s32 %s19, %s26
      %s59 = sor.u32 %s57, %s58
      %p60 = scmp.eq.s32.totalorder %s59, 0
      %s62 = sadd.s32 %s61, 1
      %s63 = scalar_select %p60, %s61, %s62
      %p66 = pneg %p60
      %p67 = scmp.eq.s32.totalorder %s11, 1
      %p68 = por %p66, %p67
      %p69 = scmp.ne.s32.totalorder %s61, %s64
      %p70 = scmp.eq.s32.totalorder %s11, 0
      %p71 = por %p69, %p70
      %p72 = scmp.ne.s32.totalorder %s61, %s64
      %p73 = scmp.eq.s32.totalorder %s16, 1
      %p74 = por %p72, %p73
      %p75 = scmp.ne.s32.totalorder %s64, %s65
      %p76 = scmp.eq.s32.totalorder %s16, 0
      %p77 = por %p75, %p76
      %p78 = scmp.ne.s32.totalorder %s64, %s65
      %p79 = scmp.eq.s32.totalorder %s17, 1
      %p80 = por %p78, %p79
      %p82 = scmp.ne.s32.totalorder %s65, %s81
      %p83 = scmp.eq.s32.totalorder %s17, 0
      %p84 = por %p82, %p83
      %p85 = scmp.le.s32.totalorder 1, %s11
      %p86 = scmp.lt.s32.totalorder %s11, 3
      %p87 = pnand %p85, %p86
      %p88 = pneg %p87
      // Predicated region
      $region9: #{tpu_custom_call.1} parent=5 // pred_check
        _
      $region10: #{tpu_custom_call.1} parent=5 // pred_check_branch
        %90 = sbr.rel (%p87) target = $region12
      $region11: #{tpu_custom_call.1} parent=5 // pred_region
        %s91 = ssub.s32 %s11, 1
        // Predicated region
        $region13: #{tpu_custom_call.1} parent=11 // pred_check
          %p92 = pneg %p49
        $region14: #{tpu_custom_call.1} parent=11 // pred_check_branch
          %94 = sbr.rel (%p92) target = $region16
        $region15: #{tpu_custom_call.1} parent=11 // pred_region
          %s96 = ssub.s32 256, 256
          %97 = vsyncadd [#allocation3], %s96
          %s98 = smul.addr %s20, 2
          %s99 = smul.addr %s98, 128
          %s100 = scalar_lea.hbm %s0, %s99
          %s102 = sshll.u32 [#allocation2], 4
          %s103 = int_to_ptr.vmem [resolvable:$true] %s102
          %105 = dma.hbm_to_vmem [thread:$0]  %s100, 256, %s103, [#allocation3]
        $region16: #{tpu_custom_call.1} parent=11 // pred_fallthru
          _
      $region12: #{tpu_custom_call.1} parent=5 // pred_fallthru
        _
      %p106 = scmp.lt.s32.totalorder %s11, 2
      // Predicated region
      $region17: #{tpu_custom_call.1} parent=5 // pred_check
        %p107 = pneg %p106
      $region18: #{tpu_custom_call.1} parent=5 // pred_check_branch
        %109 = sbr.rel (%p107) target = $region20
      $region19: #{tpu_custom_call.1} parent=5 // pred_region
        _
      $region20: #{tpu_custom_call.1} parent=5 // pred_fallthru
        _
      %p110 = scmp.le.s32.totalorder 1, %s11
      %p111 = scmp.lt.s32.totalorder %s11, 3
      %p112 = pnand %p110, %p111
      %p113 = pneg %p112
      // Predicated region
      $region21: #{tpu_custom_call.1} parent=5 // pred_check
        _
      $region22: #{tpu_custom_call.1} parent=5 // pred_check_branch
        %115 = sbr.rel (%p112) target = $region24
      $region23: #{tpu_custom_call.1} parent=5 // pred_region
        %s116 = ssub.s32 %s11, 1
        // Predicated region
        $region25: #{tpu_custom_call.1} parent=23 // pred_check
          %p117 = pneg %p49
        $region26: #{tpu_custom_call.1} parent=23 // pred_check_branch
          %119 = sbr.rel (%p117) target = $region28
        $region27: #{tpu_custom_call.1} parent=23 // pred_region
          %120 = dma.done [#allocation3], 256
        $region28: #{tpu_custom_call.1} parent=23 // pred_fallthru
          _
        %p121 = pneg %p49
        %p122 = pneg %p46
        %p123 = pneg %p77
        %p124 = pneg %p74
        %s125 = sand.u32 %s64, 1
        %s126 = scalar_lea.sflag [#allocation4], %s125
        %s127 = sand.u32 %s64, 1
        %s128 = smul.addr %s127, 16
        %s129 = scalar_lea.vmem [#allocation5], %s128
        %s130 = smul.u32 2, %s21
        %v131 = vld [vmem:[#allocation2] sm:$0xff]
        %v132 = vld [vmem:[#allocation2 + $0x8] sm:$0xff]
        %133 = vst [vmem:[%s129] sm:$0xff] %v131
        %134 = vst [vmem:[%s129 + $0x8] sm:$0xff] %v132
        %s135 = sand.u32 %s64, 1
        %s136 = scalar_lea.sflag [#allocation4], %s135
        %s137 = sand.u32 %s64, 1
        %s138 = smul.addr %s137, 16
        %s139 = scalar_lea.vmem [#allocation5], %s138
        // Predicated region
        $region29: #{tpu_custom_call.1} parent=23 // pred_check
          %p140 = pneg %p74
        $region30: #{tpu_custom_call.1} parent=23 // pred_check_branch
          %142 = sbr.rel (%p140) target = $region32
        $region31: #{tpu_custom_call.1} parent=23 // pred_region
          %s143 = smul.u32 2, %s21
          %s145 = ssub.s32 256, 256
          %146 = vsyncadd %s136, %s145
          %s147 = smul.addr %s20, 4
          %s148 = sadd.s32 %s143, %s147
          %s149 = smul.addr %s148, 128
          %s150 = scalar_lea.hbm %s1, %s149
          %s152 = sshll.u32 %s139, 4
          %s153 = int_to_ptr.vmem [resolvable:$true] %s152
          %155 = dma.vmem_to_hbm [thread:$0]  %s153, 256, %s150, %s136
        $region32: #{tpu_custom_call.1} parent=23 // pred_fallthru
          _
      $region24: #{tpu_custom_call.1} parent=5 // pred_fallthru
        _
      %p156 = scmp.le.s32.totalorder 2, %s11
      // Predicated region
      $region33: #{tpu_custom_call.1} parent=5 // pred_check
        %p157 = pneg %p156
      $region34: #{tpu_custom_call.1} parent=5 // pred_check_branch
        %159 = sbr.rel (%p157) target = $region36
      $region35: #{tpu_custom_call.1} parent=5 // pred_region
        %s160 = ssub.s32 %s11, 2
        // Predicated region
        $region37: #{tpu_custom_call.1} parent=35 // pred_check
          %p161 = pneg %p80
        $region38: #{tpu_custom_call.1} parent=35 // pred_check_branch
          %163 = sbr.rel (%p161) target = $region40
        $region39: #{tpu_custom_call.1} parent=35 // pred_region
          %s164 = sand.u32 %s65, 1
          %s165 = scalar_lea.sflag [#allocation4], %s164
          %s166 = sand.u32 %s65, 1
          %s167 = smul.addr %s166, 16
          %s168 = scalar_lea.vmem [#allocation5], %s167
          %169 = dma.done %s165, 256
        $region40: #{tpu_custom_call.1} parent=35 // pred_fallthru
          _
      $region36: #{tpu_custom_call.1} parent=5 // pred_fallthru
        _
    $region6: #{tpu_custom_call.1} parent=1 // loop_footer
      %s15 = sadd.s32 1, %s11
    $region7: #{tpu_custom_call.1} parent=1 // loop_footer_branch
      %10 = sbr.rel target = $region3
    $region8: #{tpu_custom_call.1} parent=1 // loop_exit
      _
    %170 = vsyncpa [#allocation3], 1
    %s171 = scalar_lea.sflag [#allocation3], 1
    %172 = vsyncpa %s171, 1
    %173 = vsyncpa [#allocation4], 1
    %s174 = scalar_lea.sflag [#allocation4], 1
    %175 = vsyncpa %s174, 1

</llo_original>
